<compile_context>
chip_gen: v7x
topology: tpu7x:2x2x1
jax: 0.10.0
libtpu: 0.0.40
codegen_flags: <defaults>
</compile_context>

<pallas_src>
import math
import functools

import jax
import jax.numpy as jnp
from jax.experimental import pallas as pl
from jax.experimental.pallas import tpu as pltpu


def make_pos_encoding(max_len: int, dim_model: int) -> jnp.ndarray:
    """Replicates the buffer built in PositionalEncoding.__init__ -> (max_len, 1, dim_model)."""
    positions = jnp.arange(max_len, dtype=jnp.float32).reshape(-1, 1)           # (max_len, 1)
    division_term = jnp.exp(
        jnp.arange(0, dim_model, 2, dtype=jnp.float32) * (-math.log(10000.0) / dim_model)
    )                                                                            # (dim_model//2,)
    pe = jnp.zeros((max_len, dim_model), dtype=jnp.float32)
    pe = pe.at[:, 0::2].set(jnp.sin(positions * division_term))
    pe = pe.at[:, 1::2].set(jnp.cos(positions * division_term))
    # unsqueeze(0).transpose(0,1) -> (max_len, 1, dim_model)
    return pe.reshape(max_len, 1, dim_model)


def _fmix32(x):
    """MurmurHash3 finalizer — good avalanche, pure VPU integer ops."""
    x = x ^ (x >> jnp.uint32(16))
    x = x * jnp.uint32(0x7FEB352D)
    x = x ^ (x >> jnp.uint32(15))
    x = x * jnp.uint32(0x846CA68B)
    x = x ^ (x >> jnp.uint32(16))
    return x


def _pos_enc_kernel(seed_ref, x_ref, pe_ref, o_ref, *,
                    batch: int, dropout_p: float, apply_dropout: bool):
    # x_ref: (TS, B*D)   pe_ref: (TS, D)   o_ref: (TS, B*D)
    pe_tile = pe_ref[...]
    if batch > 1:
        # Broadcast positional rows across the batch chunks of the flattened
        # lane axis: [pe | pe | ... | pe]  (static unroll, lane-dim concat).
        pe_row = jnp.concatenate([pe_tile] * batch, axis=-1)
    else:
        pe_row = pe_tile

    y = x_ref[...] + pe_row

    if apply_dropout and dropout_p > 0.0:
        ts, bd = y.shape
        # Global element index (unique across grid tiles -> no repeated masks).
        row = jax.lax.broadcasted_iota(jnp.int32, (ts, bd), 0)
        col = jax.lax.broadcasted_iota(jnp.int32, (ts, bd), 1)
        gidx = (pl.program_id(0) * ts + row) * bd + col
        seed_mix = seed_ref[0].astype(jnp.uint32) * jnp.uint32(0x9E3779B9)
        h = _fmix32(gidx.astype(jnp.uint32) ^ seed_mix)
        # Top 24 random bits -> uniform integer in [0, 2^24); signed compare.
        r24 = (h >> jnp.uint32(8)).astype(jnp.int32)
        thresh = jnp.int32(int(round(dropout_p * float(1 << 24))))
        keep = r24 >= thresh
        scale = jnp.asarray(1.0 / (1.0 - dropout_p), dtype=y.dtype)
        y = jnp.where(keep, y * scale, jnp.zeros_like(y))

    o_ref[...] = y.astype(o_ref.dtype)


def positional_encoding_forward(x, pe_full, *, dropout_p: float, training: bool,
                                seed: int = 0, tile_bytes: int = 2 << 20):
    """x: (seq_len, batch, dim_model); pe_full: (max_len, 1, dim_model)."""
    S, B, D = x.shape
    BD = B * D

    # Lane-dense 2-D view: (S, B*D).  Row-major trailing-dim merge is free.
    x2d = x.reshape(S, BD)
    # Positional table as (max_len, D) in the activation dtype (no [:S] slice —
    # the BlockSpec index_map picks the rows tile-by-tile).
    pe2d = pe_full.reshape(pe_full.shape[0], D).astype(x.dtype)

    # Sequence tile sized for ~tile_bytes per buffer (well under the 16/32 MiB
    # scoped-VMEM defaults with double-buffered in+out on every generation,
    # including v7x's 64 MiB physical VMEM).
    itemsize = jnp.dtype(x.dtype).itemsize
    rows_fit = max(1, tile_bytes // (BD * itemsize))
    ts = int(min(S, max(8, (rows_fit // 8) * 8)))
    grid = (pl.cdiv(S, ts),)

    seed_arr = jnp.asarray([seed], dtype=jnp.int32)

    kernel = functools.partial(
        _pos_enc_kernel,
        batch=B,
        dropout_p=float(dropout_p),
        apply_dropout=bool(training),
    )

    out2d = pl.pallas_call(
        kernel,
        out_shape=jax.ShapeDtypeStruct((S, BD), x.dtype),
        grid_spec=pltpu.PrefetchScalarGridSpec(
            num_scalar_prefetch=1,               # dropout seed -> SMEM
            grid=grid,
            in_specs=[
                pl.BlockSpec((ts, BD), lambda i, seed: (i, 0)),   # token embeddings
                pl.BlockSpec((ts, D), lambda i, seed: (i, 0)),    # positional rows
            ],
            out_specs=pl.BlockSpec((ts, BD), lambda i, seed: (i, 0)),
        ),
        compiler_params=pltpu.CompilerParams(
            dimension_semantics=("parallel",),   # elementwise: shard across TCs (v7x)
        ),
    )(seed_arr, x2d, pe2d)

    return out2d.reshape(S, B, D)


if __name__ == "__main__":
    # Module hyper-params (deterministic, in-script).
    dim_model, dropout_p, max_len = 32, 0.1, 16
    seq_len, batch = 8, 2

    pe_full = make_pos_encoding(max_len, dim_model)

    key = jax.random.PRNGKey(0)
    x = jax.random.normal(key, (seq_len, batch, dim_model), dtype=jnp.float32)

    # Eval mode (dropout = identity): exact forward semantics vs pure-JAX ref.
    y_eval = positional_encoding_forward(x, pe_full, dropout_p=dropout_p, training=False)
    y_eval = jax.block_until_ready(y_eval)
    ref = x + pe_full[:seq_len]
    assert y_eval.shape == (seq_len, batch, dim_model)
    assert jnp.allclose(y_eval, ref, atol=1e-6, rtol=1e-6), "eval-mode mismatch"

    # Training mode: in-kernel counter-hash dropout (inverted-dropout semantics;
    # RNG stream necessarily differs from torch).
    y_train = positional_encoding_forward(
        x, pe_full, dropout_p=dropout_p, training=True, seed=1234
    )
    y_train = jax.block_until_ready(y_train)
    assert y_train.shape == (seq_len, batch, dim_model)
    scale = 1.0 / (1.0 - dropout_p)
    kept = y_train != 0
    # Kept elements must equal (x + pe) / (1 - p); dropped elements are exactly 0.
    assert jnp.allclose(
        jnp.where(kept, y_train, ref * scale), ref * scale, atol=1e-5
    ), "train-mode kept-value mismatch"
    drop_frac = float(1.0 - jnp.mean(kept.astype(jnp.float32)))
    assert 0.0 <= drop_frac <= 0.5, "dropout rate implausible"

    print("KERNEL_OK")
</pallas_src>

<mosaic_0001>
module attributes {stable_mosaic.version = 11 : i64} {
  func.func @_pos_enc_kernel(%arg0: i32, %arg1: memref<1xi32, #tpu.memory_space<smem>>, %arg2: memref<8x64xf32, #tpu.memory_space<vmem>>, %arg3: memref<8x32xf32, #tpu.memory_space<vmem>>, %arg4: memref<8x64xf32, #tpu.memory_space<vmem>>) attributes {dimension_semantics = [#tpu.dimension_semantics<parallel>], iteration_bounds = array<i64: 1>, scalar_prefetch = 1 : i64, scratch_operands = 0 : i64, tpu.core_type = #tpu.core_type<tc>, window_params = [{transform_indices = @transform_0, window_bounds = array<i64: 8, 64>}, {transform_indices = @transform_1, window_bounds = array<i64: 8, 32>}, {transform_indices = @transform_2, window_bounds = array<i64: 8, 64>}]} {
    %c0 = arith.constant 0 : index
    %c0_0 = arith.constant 0 : index
    %0 = vector.load %arg3[%c0, %c0_0] : memref<8x32xf32, #tpu.memory_space<vmem>>, vector<8x32xf32>
    %1 = tpu.concatenate %0, %0 in 1 : vector<8x32xf32>, vector<8x32xf32> -> vector<8x64xf32>
    %c0_1 = arith.constant 0 : index
    %c0_2 = arith.constant 0 : index
    %2 = vector.load %arg2[%c0_1, %c0_2] : memref<8x64xf32, #tpu.memory_space<vmem>>, vector<8x64xf32>
    %3 = arith.addf %2, %1 : vector<8x64xf32>
    %c0_3 = arith.constant 0 : index
    %c0_4 = arith.constant 0 : index
    %4 = vector.load %arg4[%c0_3, %c0_4] : memref<8x64xf32, #tpu.memory_space<vmem>>, vector<8x64xf32>
    tpu.vector_store %arg4[%c0_3, %c0_4], %3 {strides = array<i32>} : memref<8x64xf32, #tpu.memory_space<vmem>>, vector<8x64xf32>,
    return
  }
  func.func @transform_0(%arg0: i32, %arg1: memref<1xi32, #tpu.memory_space<smem>>) -> (i32, i32) {
    %c0_i32 = arith.constant 0 : i32
    %c0_i32_0 = arith.constant 0 : i32
    return %arg0, %c0_i32 : i32, i32
  }
  func.func @transform_1(%arg0: i32, %arg1: memref<1xi32, #tpu.memory_space<smem>>) -> (i32, i32) {
    %c0_i32 = arith.constant 0 : i32
    %c0_i32_0 = arith.constant 0 : i32
    return %arg0, %c0_i32 : i32, i32
  }
  func.func @transform_2(%arg0: i32, %arg1: memref<1xi32, #tpu.memory_space<smem>>) -> (i32, i32) {
    %c0_i32 = arith.constant 0 : i32
    %c0_i32_0 = arith.constant 0 : i32
    return %arg0, %c0_i32 : i32, i32
  }
}

</mosaic_0001>

<llo_original>
// kernel: tpu_custom_call.1
$region0: #{tpu_custom_call.1}
  #allocation0 [shape = 'u32[]', space=smem, size = 0x4, offset = 0x4, fixed_abs, tag = 'smem constant byte address 0x4 - core index']
  #allocation1 [shape = 'u32[144,128]{1,0:T(1,128)}', space=vmem, size = 0x12000, scoped, tag = 'internal scratch']
  #allocation2 [shape = 's32[1]{0}', space=sflag, size = 0x4, scoped, tag = 'scoped memory for tpu_custom_call.1']
  #allocation3 [shape = 's32[1]{0:T(128)S(6)}', space=smem, size = 0x200, scoped, tag = 'prefetched SMEM operand 0']
  %s0 = inlined_call_operand.<no memory space> [shape: s32[1], index: 0, kind: input, shape index: {}]
  %s1 = inlined_call_operand.hbm [shape: f32[8,64], index: 1, kind: input, shape index: {}]
  %s2 = inlined_call_operand.hbm [shape: f32[16,32], index: 2, kind: input, shape index: {}]
  %s3 = inlined_call_operand.hbm [shape: f32[8,64], index: 3, kind: output, shape index: {}]
  %s4 = sld [smem:[#allocation0]]
  $region26: #{tpu_custom_call.1} parent=0
    _
  %s6 = ssub.s32 1, %s4
  %s7 = scalar_select 0, %s6, %s4
  %8 = sst [smem:[#allocation3]] %s0
  $region1: #{tpu_custom_call.1} parent=0
    #allocation4 [shape = 'u8[4096]{0}', space=vmem, size = 0x1000, scoped, tag = 'input window, operand 1, single buffered']
    #allocation5 [shape = 's32[1]{0}', space=sflag, size = 0x4, scoped, tag = 'scoped memory for tpu_custom_call.1']
    #allocation6 [shape = 's32[1]{0}', space=sflag, size = 0x4, scoped, tag = 'scoped memory for tpu_custom_call.1']
    #allocation7 [shape = 'u8[4096]{0}', space=vmem, size = 0x1000, scoped, tag = 'input window, operand 2, single buffered']
    #allocation8 [shape = 's32[1]{0}', space=sflag, size = 0x4, scoped, tag = 'scoped memory for tpu_custom_call.1']
    #allocation9 [shape = 'u8[4096]{0}', space=vmem, size = 0x1000, scoped, tag = 'output window, operand 0, single buffered']
    %9 = vsyncpa [#allocation5], 0
    %10 = vsyncpa [#allocation8], 0
    %11 = vsyncpa [#allocation6], 0
    // Predicated region
    $region2: #{tpu_custom_call.1} parent=1 // pred_check
      _
    $region3: #{tpu_custom_call.1} parent=1 // pred_check_branch
      %13 = sbr.rel (0) target = $region5
    $region4: #{tpu_custom_call.1} parent=1 // pred_region
      %s15 = ssub.s32 128, 128
      %16 = vsyncadd [#allocation5], %s15
      %s18 = sshll.u32 [#allocation4], 4
      %s19 = int_to_ptr.vmem [resolvable:$true] %s18
      %21 = dma.hbm_to_vmem [thread:$0]  %s1, 128, %s19, [#allocation5]
    $region5: #{tpu_custom_call.1} parent=1 // pred_fallthru
      _
    // Predicated region
    $region6: #{tpu_custom_call.1} parent=1 // pred_check
      _
    $region7: #{tpu_custom_call.1} parent=1 // pred_check_branch
      %23 = sbr.rel (0) target = $region9
    $region8: #{tpu_custom_call.1} parent=1 // pred_region
      %s25 = ssub.s32 128, 128
      %26 = vsyncadd [#allocation8], %s25
      %s28 = sshll.u32 [#allocation7], 4
      %s29 = int_to_ptr.vmem [resolvable:$true] %s28
      %31 = dma.hbm_to_vmem [thread:$0]  %s2, 128, %s29, [#allocation8]
    $region9: #{tpu_custom_call.1} parent=1 // pred_fallthru
      _
    // Predicated region
    $region10: #{tpu_custom_call.1} parent=1 // pred_check
      _
    $region11: #{tpu_custom_call.1} parent=1 // pred_check_branch
      %33 = sbr.rel (0) target = $region13
    $region12: #{tpu_custom_call.1} parent=1 // pred_region
      %34 = dma.done [#allocation5], 128
    $region13: #{tpu_custom_call.1} parent=1 // pred_fallthru
      _
    // Predicated region
    $region14: #{tpu_custom_call.1} parent=1 // pred_check
      _
    $region15: #{tpu_custom_call.1} parent=1 // pred_check_branch
      %36 = sbr.rel (0) target = $region17
    $region16: #{tpu_custom_call.1} parent=1 // pred_region
      %37 = dma.done [#allocation8], 128
    $region17: #{tpu_custom_call.1} parent=1 // pred_fallthru
      _
    %v38 = vld [vmem:[#allocation7] sm:$0xff]
    %40 = vrot.lane.b32.xlu0 %v38, 32
    %v41 = vpop.permute.xlu0 %40
    %vm43 = vcmask 261120
    %v44 = vsel %vm43, %v38, %v41
    %v45 = vld [vmem:[#allocation4] sm:$0xff]
    %v46 = vadd.f32 %v45, %v44
    %vm47 = vcmask 523264
    %48 = vst.msk [vmem:[#allocation9] sm:$0xff] %vm47, %v46
    // Predicated region
    $region18: #{tpu_custom_call.1} parent=1 // pred_check
      _
    $region19: #{tpu_custom_call.1} parent=1 // pred_check_branch
      %50 = sbr.rel (0) target = $region21
    $region20: #{tpu_custom_call.1} parent=1 // pred_region
      %s52 = ssub.s32 128, 128
      %53 = vsyncadd [#allocation6], %s52
      %s55 = sshll.u32 [#allocation9], 4
      %s56 = int_to_ptr.vmem [resolvable:$true] %s55
      %58 = dma.vmem_to_hbm [thread:$0]  %s56, 128, %s3, [#allocation6]
    $region21: #{tpu_custom_call.1} parent=1 // pred_fallthru
      _
    // Predicated region
    $region22: #{tpu_custom_call.1} parent=1 // pred_check
      _
    $region23: #{tpu_custom_call.1} parent=1 // pred_check_branch
      %60 = sbr.rel (0) target = $region25
    $region24: #{tpu_custom_call.1} parent=1 // pred_region
      %61 = dma.done [#allocation6], 128
    $region25: #{tpu_custom_call.1} parent=1 // pred_fallthru
      _
    %62 = vsyncpa [#allocation5], 1
    %63 = vsyncpa [#allocation8], 1
    %64 = vsyncpa [#allocation6], 1

</llo_original>
